<compile_context>
chip_gen: v7x
topology: tpu7x:2x2x1
jax: 0.10.0
libtpu: 0.0.40
codegen_flags: <defaults>
</compile_context>

<pallas_src>
import jax
import jax.numpy as jnp
from jax.experimental import pallas as pl
from jax.experimental.pallas import tpu as pltpu

BN_EPS = 1e-5


def _bn_fold_kernel(x_ref, gamma_ref, beta_ref, scale_ref, shift_ref):
    """Fold training-mode BatchNorm1d(C*V) batch stats into per-(v, c) scale/shift."""
    x = x_ref[...]                                   # (V, M, C), M = N*T
    mean = jnp.mean(x, axis=1)                       # (V, C)
    xc = x - mean[:, None, :]                        # mean-centered (numerically stable)
    var = jnp.mean(xc * xc, axis=1)                  # biased variance (training-mode BN)
    inv = jax.lax.rsqrt(var + BN_EPS)
    scale = gamma_ref[...] * inv                     # (V, C)
    scale_ref[...] = scale
    shift_ref[...] = beta_ref[...] - mean * scale


def _embed_rows_kernel(x_ref, scale_ref, shift_ref, w1_ref, b1_ref, w2_ref, b2_ref, o_ref):
    # BatchNorm apply, folded to a per-row 3-lane scale/shift on the raw rows.
    y = x_ref[...] * scale_ref[...] + shift_ref[...]                     # (tm, C)
    # Conv2d(C, 64, k=1) + ReLU  (1x1 conv == matmul over channels).
    h = jnp.dot(y, w1_ref[...], preferred_element_type=jnp.float32) + b1_ref[...]
    h = jnp.maximum(h, 0.0)
    # Conv2d(64, out_channels, k=1) + ReLU -- bf16 MXU operands, f32 accumulation.
    z = jnp.dot(h.astype(jnp.bfloat16), w2_ref[...],
                preferred_element_type=jnp.float32) + b2_ref[...]
    o_ref[...] = jnp.maximum(z, 0.0)


def _pick_row_tile(num_rows, cap=256):
    """Largest multiple of 8 that divides num_rows and is <= cap (caps vreg/VMEM pressure)."""
    if num_rows <= cap:
        return num_rows
    for t in range(cap - cap % 8, 7, -8):
        if num_rows % t == 0:
            return t
    return num_rows   # no clean divisor: single full-extent block (still a valid BlockSpec)


def embed_forward(x, params, *, hidden=64, out_channels=128):
    """x: (N, C, V, T) float32  ->  (N, out_channels, V, T) float32 (training-mode BN)."""
    N, C, V, T = x.shape
    M = N * T
    R = V * M

    # (N, C, V, T) -> (V, N, T, C): per-joint channels-last rows, row index = v*M + n*T + t.
    x_vmc = jnp.transpose(x, (2, 0, 3, 1)).astype(jnp.float32).reshape(V, M, C)
    x_rows = x_vmc.reshape(R, C)

    # BatchNorm1d(C*V): flat channel index is c*V + v  (from x.view(N, C*V, T)).
    gamma_vc = params["bn_gamma"].reshape(C, V).T.astype(jnp.float32)    # (V, C)
    beta_vc = params["bn_beta"].reshape(C, V).T.astype(jnp.float32)

    # --- Stage 1: cheap stats pre-pass, folded into per-(v, c) scale/shift ---
    scale_vc, shift_vc = pl.pallas_call(
        _bn_fold_kernel,
        out_shape=(jax.ShapeDtypeStruct((V, C), jnp.float32),
                   jax.ShapeDtypeStruct((V, C), jnp.float32)),
        grid=(1,),
        in_specs=[
            pl.BlockSpec((V, M, C), lambda i: (0, 0, 0)),
            pl.BlockSpec((V, C), lambda i: (0, 0)),
            pl.BlockSpec((V, C), lambda i: (0, 0)),
        ],
        out_specs=(pl.BlockSpec((V, C), lambda i: (0, 0)),
                   pl.BlockSpec((V, C), lambda i: (0, 0))),
    )(x_vmc, gamma_vc, beta_vc)

    # Per-row scale/shift (R, C): tiny 3-lane side inputs streamed with the row tiles.
    scale_rows = jnp.broadcast_to(scale_vc[:, None, :], (V, M, C)).reshape(R, C)
    shift_rows = jnp.broadcast_to(shift_vc[:, None, :], (V, M, C)).reshape(R, C)

    w1 = params["w1"].astype(jnp.float32)                          # (C, hidden)
    b1 = params["b1"].reshape(1, hidden).astype(jnp.float32)
    w2 = params["w2"].astype(jnp.bfloat16)                         # (hidden, out) bf16 MXU operand
    b2 = params["b2"].reshape(1, out_channels).astype(jnp.float32)

    tm = _pick_row_tile(R)
    grid = (R // tm,)

    # --- Stage 2: row-tiled BN-apply + two 1x1 convs ---
    out_rows = pl.pallas_call(
        _embed_rows_kernel,
        out_shape=jax.ShapeDtypeStruct((R, out_channels), jnp.float32),
        grid=grid,
        in_specs=[
            pl.BlockSpec((tm, C), lambda i: (i, 0)),
            pl.BlockSpec((tm, C), lambda i: (i, 0)),
            pl.BlockSpec((tm, C), lambda i: (i, 0)),
            pl.BlockSpec((C, hidden), lambda i: (0, 0)),            # constant index: resident
            pl.BlockSpec((1, hidden), lambda i: (0, 0)),
            pl.BlockSpec((hidden, out_channels), lambda i: (0, 0)),
            pl.BlockSpec((1, out_channels), lambda i: (0, 0)),
        ],
        out_specs=pl.BlockSpec((tm, out_channels), lambda i: (i, 0)),
        compiler_params=pltpu.CompilerParams(dimension_semantics=("parallel",)),
    )(x_rows, scale_rows, shift_rows, w1, b1, w2, b2)

    # Restore PyTorch's (N, out_channels, V, T) layout to preserve module semantics.
    # TODO(synk): in a fused pipeline the consumer should take (V*N*T, out_channels) rows
    # directly; this transpose re-reads/re-writes the full output in XLA.
    return jnp.transpose(out_rows.reshape(V, N, T, out_channels), (1, 3, 0, 2))


def init_params(key, in_channels=3, num_node=25, hidden=64, out_channels=128):
    """Deterministic synthetic parameters matching the PyTorch module's shapes."""
    k = jax.random.split(key, 6)
    return dict(
        # nn.BatchNorm1d(in_channels * num_node): weight / bias of shape (C*V,)
        bn_gamma=1.0 + 0.1 * jax.random.normal(k[0], (in_channels * num_node,), jnp.float32),
        bn_beta=0.1 * jax.random.normal(k[1], (in_channels * num_node,), jnp.float32),
        # nn.Conv2d(C, 64, 1): weight (64, C, 1, 1) stored transposed as (C, 64)
        w1=jax.random.normal(k[2], (in_channels, hidden), jnp.float32) / jnp.sqrt(in_channels),
        b1=0.1 * jax.random.normal(k[3], (hidden,), jnp.float32),
        # nn.Conv2d(64, out_channels, 1): weight (out, 64, 1, 1) stored transposed as (64, out)
        w2=jax.random.normal(k[4], (hidden, out_channels), jnp.float32) / jnp.sqrt(hidden),
        b2=0.1 * jax.random.normal(k[5], (out_channels,), jnp.float32),
    )
    # TODO(synk): BatchNorm running-stat updates (a training side effect) are not reproduced;
    # normalization itself uses in-kernel batch statistics like PyTorch's training-mode forward.


if __name__ == "__main__":
    key = jax.random.PRNGKey(0)
    pkey, xkey = jax.random.split(key)

    N, C, V, T = 2, 3, 25, 16        # V must be 25 (norm_data default num_node=25)
    params = init_params(pkey, in_channels=C, num_node=V, hidden=64, out_channels=128)
    x = jax.random.normal(xkey, (N, C, V, T), jnp.float32)

    y = embed_forward(x, params, hidden=64, out_channels=128)
    jax.block_until_ready(y)
    assert y.shape == (N, 128, V, T), y.shape
    print("KERNEL_OK")
</pallas_src>

<mosaic_0001>
module attributes {stable_mosaic.version = 11 : i64} {
  func.func @_bn_fold_kernel(%arg0: i32, %arg1: memref<25x32x3xf32, #tpu.memory_space<vmem>>, %arg2: memref<25x3xf32, #tpu.memory_space<vmem>>, %arg3: memref<25x3xf32, #tpu.memory_space<vmem>>, %arg4: memref<25x3xf32, #tpu.memory_space<vmem>>, %arg5: memref<25x3xf32, #tpu.memory_space<vmem>>) attributes {dimension_semantics = [#tpu.dimension_semantics<arbitrary>], iteration_bounds = array<i64: 1>, scalar_prefetch = 0 : i64, scratch_operands = 0 : i64, tpu.core_type = #tpu.core_type<tc>, window_params = [{pipeline_mode = #tpu.pipeline_mode<synchronous>, transform_indices = @transform_0, window_bounds = array<i64: 25, 32, 3>}, {pipeline_mode = #tpu.pipeline_mode<synchronous>, transform_indices = @transform_1, window_bounds = array<i64: 25, 3>}, {pipeline_mode = #tpu.pipeline_mode<synchronous>, transform_indices = @transform_2, window_bounds = array<i64: 25, 3>}, {pipeline_mode = #tpu.pipeline_mode<synchronous>, transform_indices = @transform_3, window_bounds = array<i64: 25, 3>}, {pipeline_mode = #tpu.pipeline_mode<synchronous>, transform_indices = @transform_4, window_bounds = array<i64: 25, 3>}]} {
    %c0 = arith.constant 0 : index
    %c0_0 = arith.constant 0 : index
    %c0_1 = arith.constant 0 : index
    %0 = vector.load %arg1[%c0, %c0_0, %c0_1] : memref<25x32x3xf32, #tpu.memory_space<vmem>>, vector<25x32x3xf32>
    %cst = arith.constant dense<0.000000e+00> : vector<25x3xf32>
    %1 = vector.multi_reduction <add>, %0, %cst [1] : vector<25x32x3xf32> to vector<25x3xf32>
    %cst_2 = arith.constant 3.200000e+01 : f32
    %2 = vector.broadcast %cst_2 : f32 to vector<25x3xf32>
    %3 = arith.divf %1, %2 : vector<25x3xf32>
    %4 = vector.shape_cast %3 : vector<25x3xf32> to vector<25x1x3xf32>
    %5 = vector.broadcast %4 : vector<25x1x3xf32> to vector<25x32x3xf32>
    %6 = arith.subf %0, %5 : vector<25x32x3xf32>
    %7 = arith.mulf %6, %6 : vector<25x32x3xf32>
    %cst_3 = arith.constant dense<0.000000e+00> : vector<25x3xf32>
    %8 = vector.multi_reduction <add>, %7, %cst_3 [1] : vector<25x32x3xf32> to vector<25x3xf32>
    %cst_4 = arith.constant 3.200000e+01 : f32
    %9 = vector.broadcast %cst_4 : f32 to vector<25x3xf32>
    %10 = arith.divf %8, %9 : vector<25x3xf32>
    %cst_5 = arith.constant 9.99999974E-6 : f32
    %11 = vector.broadcast %cst_5 : f32 to vector<25x3xf32>
    %12 = arith.addf %10, %11 : vector<25x3xf32>
    %13 = math.rsqrt %12 : vector<25x3xf32>
    %c0_6 = arith.constant 0 : index
    %c0_7 = arith.constant 0 : index
    %14 = vector.load %arg2[%c0_6, %c0_7] : memref<25x3xf32, #tpu.memory_space<vmem>>, vector<25x3xf32>
    %15 = arith.mulf %14, %13 : vector<25x3xf32>
    %c0_8 = arith.constant 0 : index
    %c0_9 = arith.constant 0 : index
    %16 = vector.load %arg4[%c0_8, %c0_9] : memref<25x3xf32, #tpu.memory_space<vmem>>, vector<25x3xf32>
    tpu.vector_store %arg4[%c0_8, %c0_9], %15 {strides = array<i32>} : memref<25x3xf32, #tpu.memory_space<vmem>>, vector<25x3xf32>,
    %c0_10 = arith.constant 0 : index
    %c0_11 = arith.constant 0 : index
    %17 = vector.load %arg3[%c0_10, %c0_11] : memref<25x3xf32, #tpu.memory_space<vmem>>, vector<25x3xf32>
    %18 = arith.mulf %3, %15 : vector<25x3xf32>
    %19 = arith.subf %17, %18 : vector<25x3xf32>
    %c0_12 = arith.constant 0 : index
    %c0_13 = arith.constant 0 : index
    %20 = vector.load %arg5[%c0_12, %c0_13] : memref<25x3xf32, #tpu.memory_space<vmem>>, vector<25x3xf32>
    tpu.vector_store %arg5[%c0_12, %c0_13], %19 {strides = array<i32>} : memref<25x3xf32, #tpu.memory_space<vmem>>, vector<25x3xf32>,
    return
  }
  func.func @transform_0(%arg0: i32) -> (i32, i32, i32) {
    %c0_i32 = arith.constant 0 : i32
    %c0_i32_0 = arith.constant 0 : i32
    %c0_i32_1 = arith.constant 0 : i32
    %c0_i32_2 = arith.constant 0 : i32
    return %c0_i32, %c0_i32_0, %c0_i32_1 : i32, i32, i32
  }
  func.func @transform_1(%arg0: i32) -> (i32, i32) {
    %c0_i32 = arith.constant 0 : i32
    %c0_i32_0 = arith.constant 0 : i32
    %c0_i32_1 = arith.constant 0 : i32
    return %c0_i32, %c0_i32_0 : i32, i32
  }
  func.func @transform_2(%arg0: i32) -> (i32, i32) {
    %c0_i32 = arith.constant 0 : i32
    %c0_i32_0 = arith.constant 0 : i32
    %c0_i32_1 = arith.constant 0 : i32
    return %c0_i32, %c0_i32_0 : i32, i32
  }
  func.func @transform_3(%arg0: i32) -> (i32, i32) {
    %c0_i32 = arith.constant 0 : i32
    %c0_i32_0 = arith.constant 0 : i32
    %c0_i32_1 = arith.constant 0 : i32
    return %c0_i32, %c0_i32_0 : i32, i32
  }
  func.func @transform_4(%arg0: i32) -> (i32, i32) {
    %c0_i32 = arith.constant 0 : i32
    %c0_i32_0 = arith.constant 0 : i32
    %c0_i32_1 = arith.constant 0 : i32
    return %c0_i32, %c0_i32_0 : i32, i32
  }
}

</mosaic_0001>

<llo_original>
// kernel: tpu_custom_call.1
$region0: #{tpu_custom_call.1}
  #allocation0 [shape = 'u32[]', space=smem, size = 0x4, offset = 0x4, fixed_abs, tag = 'smem constant byte address 0x4 - core index']
  #allocation1 [shape = 'u32[144,128]{1,0:T(1,128)}', space=vmem, size = 0x12000, scoped, tag = 'internal scratch']
  %s0 = inlined_call_operand.vmem [shape: f32[25,32,3], index: 0, kind: input, shape index: {}]
  %s1 = inlined_call_operand.vmem [shape: f32[25,3], index: 1, kind: input, shape index: {}]
  %s2 = inlined_call_operand.vmem [shape: f32[25,3], index: 2, kind: input, shape index: {}]
  %s3 = inlined_call_operand.vmem [shape: f32[25,3], index: 3, kind: output, shape index: {0}]
  %s4 = inlined_call_operand.vmem [shape: f32[25,3], index: 4, kind: output, shape index: {1}]
  %5 = xla_tuple %s3, %s4
  %s6 = sld [smem:[#allocation0]]
  $region30: #{tpu_custom_call.1} parent=0
    _
  %s8 = ssub.s32 1, %s6
  %s9 = scalar_select 0, %s8, %s6
  // Predicated region
  $region2: #{tpu_custom_call.1} parent=0 // pred_check
    _
  $region3: #{tpu_custom_call.1} parent=0 // pred_check_branch
    %11 = sbr.rel (0) target = $region5
  $region4: #{tpu_custom_call.1} parent=0 // pred_region
    _
  $region5: #{tpu_custom_call.1} parent=0 // pred_fallthru
    _
  // Predicated region
  $region6: #{tpu_custom_call.1} parent=0 // pred_check
    _
  $region7: #{tpu_custom_call.1} parent=0 // pred_check_branch
    %13 = sbr.rel (0) target = $region9
  $region8: #{tpu_custom_call.1} parent=0 // pred_region
    _
  $region9: #{tpu_custom_call.1} parent=0 // pred_fallthru
    _
  // Predicated region
  $region10: #{tpu_custom_call.1} parent=0 // pred_check
    _
  $region11: #{tpu_custom_call.1} parent=0 // pred_check_branch
    %15 = sbr.rel (0) target = $region13
  $region12: #{tpu_custom_call.1} parent=0 // pred_region
    _
  $region13: #{tpu_custom_call.1} parent=0 // pred_fallthru
    _
  %v16 = vld [vmem:[%s0] sm:$0xff]
  %v17 = vld [vmem:[%s0 + $0x8] sm:$0xff]
  %v18 = vld [vmem:[%s0 + $0x10] sm:$0xff]
  %v19 = vld [vmem:[%s0 + $0x18] sm:$0xff]
  %v20 = vld [vmem:[%s0 + $0x20] sm:$0xff]
  %v21 = vld [vmem:[%s0 + $0x28] sm:$0xff]
  %v22 = vld [vmem:[%s0 + $0x30] sm:$0xff]
  %v23 = vld [vmem:[%s0 + $0x38] sm:$0xff]
  %v24 = vld [vmem:[%s0 + $0x40] sm:$0xff]
  %v25 = vld [vmem:[%s0 + $0x48] sm:$0xff]
  %v26 = vld [vmem:[%s0 + $0x50] sm:$0xff]
  %v27 = vld [vmem:[%s0 + $0x58] sm:$0xff]
  %v28 = vld [vmem:[%s0 + $0x60] sm:$0xff]
  %v29 = vld [vmem:[%s0 + $0x68] sm:$0xff]
  %v30 = vld [vmem:[%s0 + $0x70] sm:$0xff]
  %v31 = vld [vmem:[%s0 + $0x78] sm:$0xff]
  %v32 = vld [vmem:[%s0 + $0x80] sm:$0xff]
  %v33 = vld [vmem:[%s0 + $0x88] sm:$0xff]
  %v34 = vld [vmem:[%s0 + $0x90] sm:$0xff]
  %v35 = vld [vmem:[%s0 + $0x98] sm:$0xff]
  %v36 = vld [vmem:[%s0 + $0xa0] sm:$0xff]
  %v37 = vld [vmem:[%s0 + $0xa8] sm:$0xff]
  %v38 = vld [vmem:[%s0 + $0xb0] sm:$0xff]
  %v39 = vld [vmem:[%s0 + $0xb8] sm:$0xff]
  %v40 = vld [vmem:[%s0 + $0xc0] sm:$0xff]
  %v41 = vld [vmem:[%s0 + $0xc8] sm:$0xff]
  %v42 = vld [vmem:[%s0 + $0xd0] sm:$0xff]
  %v43 = vld [vmem:[%s0 + $0xd8] sm:$0xff]
  %v44 = vld [vmem:[%s0 + $0xe0] sm:$0xff]
  %v45 = vld [vmem:[%s0 + $0xe8] sm:$0xff]
  %v46 = vld [vmem:[%s0 + $0xf0] sm:$0xff]
  %v47 = vld [vmem:[%s0 + $0xf8] sm:$0xff]
  %v48 = vld [vmem:[%s0 + $0x100] sm:$0xff]
  %v49 = vld [vmem:[%s0 + $0x108] sm:$0xff]
  %v50 = vld [vmem:[%s0 + $0x110] sm:$0xff]
  %v51 = vld [vmem:[%s0 + $0x118] sm:$0xff]
  %v52 = vld [vmem:[%s0 + $0x120] sm:$0xff]
  %v53 = vld [vmem:[%s0 + $0x128] sm:$0xff]
  %v54 = vld [vmem:[%s0 + $0x130] sm:$0xff]
  %v55 = vld [vmem:[%s0 + $0x138] sm:$0xff]
  %v56 = vld [vmem:[%s0 + $0x140] sm:$0xff]
  %v57 = vld [vmem:[%s0 + $0x148] sm:$0xff]
  %v58 = vld [vmem:[%s0 + $0x150] sm:$0xff]
  %v59 = vld [vmem:[%s0 + $0x158] sm:$0xff]
  %v60 = vld [vmem:[%s0 + $0x160] sm:$0xff]
  %v61 = vld [vmem:[%s0 + $0x168] sm:$0xff]
  %v62 = vld [vmem:[%s0 + $0x170] sm:$0xff]
  %v63 = vld [vmem:[%s0 + $0x178] sm:$0xff]
  %v64 = vld [vmem:[%s0 + $0x180] sm:$0xff]
  %v65 = vld [vmem:[%s0 + $0x188] sm:$0xff]
  %v66 = vld [vmem:[%s0 + $0x190] sm:$0xff]
  %v67 = vld [vmem:[%s0 + $0x198] sm:$0xff]
  %v68 = vld [vmem:[%s0 + $0x1a0] sm:$0xff]
  %v69 = vld [vmem:[%s0 + $0x1a8] sm:$0xff]
  %v70 = vld [vmem:[%s0 + $0x1b0] sm:$0xff]
  %v71 = vld [vmem:[%s0 + $0x1b8] sm:$0xff]
  %v72 = vld [vmem:[%s0 + $0x1c0] sm:$0xff]
  %v73 = vld [vmem:[%s0 + $0x1c8] sm:$0xff]
  %v74 = vld [vmem:[%s0 + $0x1d0] sm:$0xff]
  %v75 = vld [vmem:[%s0 + $0x1d8] sm:$0xff]
  %v76 = vld [vmem:[%s0 + $0x1e0] sm:$0xff]
  %v77 = vld [vmem:[%s0 + $0x1e8] sm:$0xff]
  %v78 = vld [vmem:[%s0 + $0x1f0] sm:$0xff]
  %v79 = vld [vmem:[%s0 + $0x1f8] sm:$0xff]
  %v80 = vld [vmem:[%s0 + $0x200] sm:$0xff]
  %v81 = vld [vmem:[%s0 + $0x208] sm:$0xff]
  %v82 = vld [vmem:[%s0 + $0x210] sm:$0xff]
  %v83 = vld [vmem:[%s0 + $0x218] sm:$0xff]
  %v84 = vld [vmem:[%s0 + $0x220] sm:$0xff]
  %v85 = vld [vmem:[%s0 + $0x228] sm:$0xff]
  %v86 = vld [vmem:[%s0 + $0x230] sm:$0xff]
  %v87 = vld [vmem:[%s0 + $0x238] sm:$0xff]
  %v88 = vld [vmem:[%s0 + $0x240] sm:$0xff]
  %v89 = vld [vmem:[%s0 + $0x248] sm:$0xff]
  %v90 = vld [vmem:[%s0 + $0x250] sm:$0xff]
  %v91 = vld [vmem:[%s0 + $0x258] sm:$0xff]
  %v92 = vld [vmem:[%s0 + $0x260] sm:$0xff]
  %v93 = vld [vmem:[%s0 + $0x268] sm:$0xff]
  %v94 = vld [vmem:[%s0 + $0x270] sm:$0xff]
  %v95 = vld [vmem:[%s0 + $0x278] sm:$0xff]
  %v96 = vld [vmem:[%s0 + $0x280] sm:$0xff]
  %v97 = vld [vmem:[%s0 + $0x288] sm:$0xff]
  %v98 = vld [vmem:[%s0 + $0x290] sm:$0xff]
  %v99 = vld [vmem:[%s0 + $0x298] sm:$0xff]
  %v100 = vld [vmem:[%s0 + $0x2a0] sm:$0xff]
  %v101 = vld [vmem:[%s0 + $0x2a8] sm:$0xff]
  %v102 = vld [vmem:[%s0 + $0x2b0] sm:$0xff]
  %v103 = vld [vmem:[%s0 + $0x2b8] sm:$0xff]
  %v104 = vld [vmem:[%s0 + $0x2c0] sm:$0xff]
  %v105 = vld [vmem:[%s0 + $0x2c8] sm:$0xff]
  %v106 = vld [vmem:[%s0 + $0x2d0] sm:$0xff]
  %v107 = vld [vmem:[%s0 + $0x2d8] sm:$0xff]
  %v108 = vld [vmem:[%s0 + $0x2e0] sm:$0xff]
  %v109 = vld [vmem:[%s0 + $0x2e8] sm:$0xff]
  %v110 = vld [vmem:[%s0 + $0x2f0] sm:$0xff]
  %v111 = vld [vmem:[%s0 + $0x2f8] sm:$0xff]
  %v112 = vld [vmem:[%s0 + $0x300] sm:$0xff]
  %v113 = vld [vmem:[%s0 + $0x308] sm:$0xff]
  %v114 = vld [vmem:[%s0 + $0x310] sm:$0xff]
  %v115 = vld [vmem:[%s0 + $0x318] sm:$0xff]
  %vm116 = vcmask 23552
  %v117 = vsel %vm116, %v16, 0.0
  %v118 = vsel %vm116, %v17, 0.0
  %v119 = vadd.f32 %v117, %v118
  %v120 = vsel %vm116, %v18, 0.0
  %v121 = vadd.f32 %v119, %v120
  %v122 = vsel %vm116, %v19, 0.0
  %v123 = vadd.f32 %v121, %v122
  %v124 = vrot.slane %v123, 4
  %v125 = vadd.f32 %v123, %v124
  %v126 = vrot.slane %v125, 2
  %v127 = vadd.f32 %v125, %v126
  %v128 = vrot.slane %v127, 1
  %v129 = vadd.f32 %v127, %v128
  %v130 = vsel %vm116, %v20, 0.0
  %v131 = vsel %vm116, %v21, 0.0
  %v132 = vadd.f32 %v130, %v131
  %v133 = vsel %vm116, %v22, 0.0
  %v134 = vadd.f32 %v132, %v133
  %v135 = vsel %vm116, %v23, 0.0
  %v136 = vadd.f32 %v134, %v135
  %v137 = vrot.slane %v136, 4
  %v138 = vadd.f32 %v136, %v137
  %v139 = vrot.slane %v138, 2
  %v140 = vadd.f32 %v138, %v139
  %v141 = vrot.slane %v140, 1
  %v142 = vadd.f32 %v140, %v141
  %v143 = vsel %vm116, %v24, 0.0
  %v144 = vsel %vm116, %v25, 0.0
  %v145 = vadd.f32 %v143, %v144
  %v146 = vsel %vm116, %v26, 0.0
  %v147 = vadd.f32 %v145, %v146
  %v148 = vsel %vm116, %v27, 0.0
  %v149 = vadd.f32 %v147, %v148
  %v150 = vrot.slane %v149, 4
  %v151 = vadd.f32 %v149, %v150
  %v152 = vrot.slane %v151, 2
  %v153 = vadd.f32 %v151, %v152
  %v154 = vrot.slane %v153, 1
  %v155 = vadd.f32 %v153, %v154
  %v156 = vsel %vm116, %v28, 0.0
  %v157 = vsel %vm116, %v29, 0.0
  %v158 = vadd.f32 %v156, %v157
  %v159 = vsel %vm116, %v30, 0.0
  %v160 = vadd.f32 %v158, %v159
  %v161 = vsel %vm116, %v31, 0.0
  %v162 = vadd.f32 %v160, %v161
  %v163 = vrot.slane %v162, 4
  %v164 = vadd.f32 %v162, %v163
  %v165 = vrot.slane %v164, 2
  %v166 = vadd.f32 %v164, %v165
  %v167 = vrot.slane %v166, 1
  %v168 = vadd.f32 %v166, %v167
  %v169 = vsel %vm116, %v32, 0.0
  %v170 = vsel %vm116, %v33, 0.0
  %v171 = vadd.f32 %v169, %v170
  %v172 = vsel %vm116, %v34, 0.0
  %v173 = vadd.f32 %v171, %v172
  %v174 = vsel %vm116, %v35, 0.0
  %v175 = vadd.f32 %v173, %v174
  %v176 = vrot.slane %v175, 4
  %v177 = vadd.f32 %v175, %v176
  %v178 = vrot.slane %v177, 2
  %v179 = vadd.f32 %v177, %v178
  %v180 = vrot.slane %v179, 1
  %v181 = vadd.f32 %v179, %v180
  %v182 = vsel %vm116, %v36, 0.0
  %v183 = vsel %vm116, %v37, 0.0
  %v184 = vadd.f32 %v182, %v183
  %v185 = vsel %vm116, %v38, 0.0
  %v186 = vadd.f32 %v184, %v185
  %v187 = vsel %vm116, %v39, 0.0
  %v188 = vadd.f32 %v186, %v187
  %v189 = vrot.slane %v188, 4
  %v190 = vadd.f32 %v188, %v189
  %v191 = vrot.slane %v190, 2
  %v192 = vadd.f32 %v190, %v191
  %v193 = vrot.slane %v192, 1
  %v194 = vadd.f32 %v192, %v193
  %v195 = vsel %vm116, %v40, 0.0
  %v196 = vsel %vm116, %v41, 0.0
  %v197 = vadd.f32 %v195, %v196
  %v198 = vsel %vm116, %v42, 0.0
  %v199 = vadd.f32 %v197, %v198
  %v200 = vsel %vm116, %v43, 0.0
  %v201 = vadd.f32 %v199, %v200
  %v202 = vrot.slane %v201, 4
  %v203 = vadd.f32 %v201, %v202
  %v204 = vrot.slane %v203, 2
  %v205 = vadd.f32 %v203, %v204
  %v206 = vrot.slane %v205, 1
  %v207 = vadd.f32 %v205, %v206
  %v208 = vsel %vm116, %v44, 0.0
  %v209 = vsel %vm116, %v45, 0.0
  %v210 = vadd.f32 %v208, %v209
  %v211 = vsel %vm116, %v46, 0.0
  %v212 = vadd.f32 %v210, %v211
  %v213 = vsel %vm116, %v47, 0.0
  %v214 = vadd.f32 %v212, %v213
  %v215 = vrot.slane %v214, 4
  %v216 = vadd.f32 %v214, %v215
  %v217 = vrot.slane %v216, 2
  %v218 = vadd.f32 %v216, %v217
  %v219 = vrot.slane %v218, 1
  %v220 = vadd.f32 %v218, %v219
  %v221 = vsel %vm116, %v48, 0.0
  %v222 = vsel %vm116, %v49, 0.0
  %v223 = vadd.f32 %v221, %v222
  %v224 = vsel %vm116, %v50, 0.0
  %v225 = vadd.f32 %v223, %v224
  %v226 = vsel %vm116, %v51, 0.0
  %v227 = vadd.f32 %v225, %v226
  %v228 = vrot.slane %v227, 4
  %v229 = vadd.f32 %v227, %v228
  %v230 = vrot.slane %v229, 2
  %v231 = vadd.f32 %v229, %v230
  %v232 = vrot.slane %v231, 1
  %v233 = vadd.f32 %v231, %v232
  %v234 = vsel %vm116, %v52, 0.0
  %v235 = vsel %vm116, %v53, 0.0
  %v236 = vadd.f32 %v234, %v235
  %v237 = vsel %vm116, %v54, 0.0
  %v238 = vadd.f32 %v236, %v237
  %v239 = vsel %vm116, %v55, 0.0
  %v240 = vadd.f32 %v238, %v239
  %v241 = vrot.slane %v240, 4
  %v242 = vadd.f32 %v240, %v241
  %v243 = vrot.slane %v242, 2
  %v244 = vadd.f32 %v242, %v243
  %v245 = vrot.slane %v244, 1
  %v246 = vadd.f32 %v244, %v245
  %v247 = vsel %vm116, %v56, 0.0
  %v248 = vsel %vm116, %v57, 0.0
  %v249 = vadd.f32 %v247, %v248
  %v250 = vsel %vm116, %v58, 0.0
  %v251 = vadd.f32 %v249, %v250
  %v252 = vsel %vm116, %v59, 0.0
  %v253 = vadd.f32 %v251, %v252
  %v254 = vrot.slane %v253, 4
  %v255 = vadd.f32 %v253, %v254
  %v256 = vrot.slane %v255, 2
  %v257 = vadd.f32 %v255, %v256
  %v258 = vrot.slane %v257, 1
  %v259 = vadd.f32 %v257, %v258
  %v260 = vsel %vm116, %v60, 0.0
  %v261 = vsel %vm116, %v61, 0.0
  %v262 = vadd.f32 %v260, %v261
  %v263 = vsel %vm116, %v62, 0.0
  %v264 = vadd.f32 %v262, %v263
  %v265 = vsel %vm116, %v63, 0.0
  %v266 = vadd.f32 %v264, %v265
  %v267 = vrot.slane %v266, 4
  %v268 = vadd.f32 %v266, %v267
  %v269 = vrot.slane %v268, 2
  %v270 = vadd.f32 %v268, %v269
  %v271 = vrot.slane %v270, 1
  %v272 = vadd.f32 %v270, %v271
  %v273 = vsel %vm116, %v64, 0.0
  %v274 = vsel %vm116, %v65, 0.0
  %v275 = vadd.f32 %v273, %v274
  %v276 = vsel %vm116, %v66, 0.0
  %v277 = vadd.f32 %v275, %v276
  %v278 = vsel %vm116, %v67, 0.0
  %v279 = vadd.f32 %v277, %v278
  %v280 = vrot.slane %v279, 4
  %v281 = vadd.f32 %v279, %v280
  %v282 = vrot.slane %v281, 2
  %v283 = vadd.f32 %v281, %v282
  %v284 = vrot.slane %v283, 1
  %v285 = vadd.f32 %v283, %v284
  %v286 = vsel %vm116, %v68, 0.0
  %v287 = vsel %vm116, %v69, 0.0
  %v288 = vadd.f32 %v286, %v287
  %v289 = vsel %vm116, %v70, 0.0
  %v290 = vadd.f32 %v288, %v289
  %v291 = vsel %vm116, %v71, 0.0
  %v292 = vadd.f32 %v290, %v291
  %v293 = vrot.slane %v292, 4
  %v294 = vadd.f32 %v292, %v293
  %v295 = vrot.slane %v294, 2
  %v296 = vadd.f32 %v294, %v295
  %v297 = vrot.slane %v296, 1
  %v298 = vadd.f32 %v296, %v297
  %v299 = vsel %vm116, %v72, 0.0
  %v300 = vsel %vm116, %v73, 0.0
  %v301 = vadd.f32 %v299, %v300
  %v302 = vsel %vm116, %v74, 0.0
  %v303 = vadd.f32 %v301, %v302
  %v304 = vsel %vm116, %v75, 0.0
  %v305 = vadd.f32 %v303, %v304
  %v306 = vrot.slane %v305, 4
  %v307 = vadd.f32 %v305, %v306
  %v308 = vrot.slane %v307, 2
  %v309 = vadd.f32 %v307, %v308
  %v310 = vrot.slane %v309, 1
  %v311 = vadd.f32 %v309, %v310
  %v312 = vsel %vm116, %v76, 0.0
  %v313 = vsel %vm116, %v77, 0.0
  %v314 = vadd.f32 %v312, %v313
  %v315 = vsel %vm116, %v78, 0.0
  %v316 = vadd.f32 %v314, %v315
  %v317 = vsel %vm116, %v79, 0.0
  %v318 = vadd.f32 %v316, %v317
  %v319 = vrot.slane %v318, 4
  %v320 = vadd.f32 %v318, %v319
  %v321 = vrot.slane %v320, 2
  %v322 = vadd.f32 %v320, %v321
  %v323 = vrot.slane %v322, 1
  %v324 = vadd.f32 %v322, %v323
  %v325 = vsel %vm116, %v80, 0.0
  %v326 = vsel %vm116, %v81, 0.0
  %v327 = vadd.f32 %v325, %v326
  %v328 = vsel %vm116, %v82, 0.0
  %v329 = vadd.f32 %v327, %v328
  %v330 = vsel %vm116, %v83, 0.0
  %v331 = vadd.f32 %v329, %v330
  %v332 = vrot.slane %v331, 4
  %v333 = vadd.f32 %v331, %v332
  %v334 = vrot.slane %v333, 2
  %v335 = vadd.f32 %v333, %v334
  %v336 = vrot.slane %v335, 1
  %v337 = vadd.f32 %v335, %v336
  %v338 = vsel %vm116, %v84, 0.0
  %v339 = vsel %vm116, %v85, 0.0
  %v340 = vadd.f32 %v338, %v339
  %v341 = vsel %vm116, %v86, 0.0
  %v342 = vadd.f32 %v340, %v341
  %v343 = vsel %vm116, %v87, 0.0
  %v344 = vadd.f32 %v342, %v343
  %v345 = vrot.slane %v344, 4
  %v346 = vadd.f32 %v344, %v345
  %v347 = vrot.slane %v346, 2
  %v348 = vadd.f32 %v346, %v347
  %v349 = vrot.slane %v348, 1
  %v350 = vadd.f32 %v348, %v349
  %v351 = vsel %vm116, %v88, 0.0
  %v352 = vsel %vm116, %v89, 0.0
  %v353 = vadd.f32 %v351, %v352
  %v354 = vsel %vm116, %v90, 0.0
  %v355 = vadd.f32 %v353, %v354
  %v356 = vsel %vm116, %v91, 0.0
  %v357 = vadd.f32 %v355, %v356
  %v358 = vrot.slane %v357, 4
  %v359 = vadd.f32 %v357, %v358
  %v360 = vrot.slane %v359, 2
  %v361 = vadd.f32 %v359, %v360
  %v362 = vrot.slane %v361, 1
  %v363 = vadd.f32 %v361, %v362
  %v364 = vsel %vm116, %v92, 0.0
  %v365 = vsel %vm116, %v93, 0.0
  %v366 = vadd.f32 %v364, %v365
  %v367 = vsel %vm116, %v94, 0.0
  %v368 = vadd.f32 %v366, %v367
  %v369 = vsel %vm116, %v95, 0.0
  %v370 = vadd.f32 %v368, %v369
  %v371 = vrot.slane %v370, 4
  %v372 = vadd.f32 %v370, %v371
  %v373 = vrot.slane %v372, 2
  %v374 = vadd.f32 %v372, %v373
  %v375 = vrot.slane %v374, 1
  %v376 = vadd.f32 %v374, %v375
  %v377 = vsel %vm116, %v96, 0.0
  %v378 = vsel %vm116, %v97, 0.0
  %v379 = vadd.f32 %v377, %v378
  %v380 = vsel %vm116, %v98, 0.0
  %v381 = vadd.f32 %v379, %v380
  %v382 = vsel %vm116, %v99, 0.0
  %v383 = vadd.f32 %v381, %v382
  %v384 = vrot.slane %v383, 4
  %v385 = vadd.f32 %v383, %v384
  %v386 = vrot.slane %v385, 2
  %v387 = vadd.f32 %v385, %v386
  %v388 = vrot.slane %v387, 1
  %v389 = vadd.f32 %v387, %v388
  %v390 = vsel %vm116, %v100, 0.0
  %v391 = vsel %vm116, %v101, 0.0
  %v392 = vadd.f32 %v390, %v391
  %v393 = vsel %vm116, %v102, 0.0
  %v394 = vadd.f32 %v392, %v393
  %v395 = vsel %vm116, %v103, 0.0
  %v396 = vadd.f32 %v394, %v395
  %v397 = vrot.slane %v396, 4
  %v398 = vadd.f32 %v396, %v397
  %v399 = vrot.slane %v398, 2
  %v400 = vadd.f32 %v398, %v399
  %v401 = vrot.slane %v400, 1
  %v402 = vadd.f32 %v400, %v401
  %v403 = vsel %vm116, %v104, 0.0
  %v404 = vsel %vm116, %v105, 0.0
  %v405 = vadd.f32 %v403, %v404
  %v406 = vsel %vm116, %v106, 0.0
  %v407 = vadd.f32 %v405, %v406
  %v408 = vsel %vm116, %v107, 0.0
  %v409 = vadd.f32 %v407, %v408
  %v410 = vrot.slane %v409, 4
  %v411 = vadd.f32 %v409, %v410
  %v412 = vrot.slane %v411, 2
  %v413 = vadd.f32 %v411, %v412
  %v414 = vrot.slane %v413, 1
  %v415 = vadd.f32 %v413, %v414
  %v416 = vsel %vm116, %v108, 0.0
  %v417 = vsel %vm116, %v109, 0.0
  %v418 = vadd.f32 %v416, %v417
  %v419 = vsel %vm116, %v110, 0.0
  %v420 = vadd.f32 %v418, %v419
  %v421 = vsel %vm116, %v111, 0.0
  %v422 = vadd.f32 %v420, %v421
  %v423 = vrot.slane %v422, 4
  %v424 = vadd.f32 %v422, %v423
  %v425 = vrot.slane %v424, 2
  %v426 = vadd.f32 %v424, %v425
  %v427 = vrot.slane %v426, 1
  %v428 = vadd.f32 %v426, %v427
  %v429 = vsel %vm116, %v112, 0.0
  %v430 = vsel %vm116, %v113, 0.0
  %v431 = vadd.f32 %v429, %v430
  %v432 = vsel %vm116, %v114, 0.0
  %v433 = vadd.f32 %v431, %v432
  %v434 = vsel %vm116, %v115, 0.0
  %v435 = vadd.f32 %v433, %v434
  %v436 = vrot.slane %v435, 4
  %v437 = vadd.f32 %v435, %v436
  %v438 = vrot.slane %v437, 2
  %v439 = vadd.f32 %v437, %v438
  %v440 = vrot.slane %v439, 1
  %v441 = vadd.f32 %v439, %v440
  %v442 = vrcp.pop 32.0
  %v443 = vmul.f32 %v129, %v442
  %v444 = vmul.f32 %v142, %v442
  %v445 = vmul.f32 %v155, %v442
  %v446 = vmul.f32 %v168, %v442
  %v447 = vmul.f32 %v181, %v442
  %v448 = vmul.f32 %v194, %v442
  %v449 = vmul.f32 %v207, %v442
  %v450 = vmul.f32 %v220, %v442
  %v451 = vmul.f32 %v233, %v442
  %v452 = vmul.f32 %v246, %v442
  %v453 = vmul.f32 %v259, %v442
  %v454 = vmul.f32 %v272, %v442
  %v455 = vmul.f32 %v285, %v442
  %v456 = vmul.f32 %v298, %v442
  %v457 = vmul.f32 %v311, %v442
  %v458 = vmul.f32 %v324, %v442
  %v459 = vmul.f32 %v337, %v442
  %v460 = vmul.f32 %v350, %v442
  %v461 = vmul.f32 %v363, %v442
  %v462 = vmul.f32 %v376, %v442
  %v463 = vmul.f32 %v389, %v442
  %v464 = vmul.f32 %v402, %v442
  %v465 = vmul.f32 %v415, %v442
  %v466 = vmul.f32 %v428, %v442
  %v467 = vmul.f32 %v441, %v442
  %v468 = vsub.f32 %v16, %v443
  %v469 = vsub.f32 %v17, %v443
  %v470 = vsub.f32 %v18, %v443
  %v471 = vsub.f32 %v19, %v443
  %v472 = vsub.f32 %v20, %v444
  %v473 = vsub.f32 %v21, %v444
  %v474 = vsub.f32 %v22, %v444
  %v475 = vsub.f32 %v23, %v444
  %v476 = vsub.f32 %v24, %v445
  %v477 = vsub.f32 %v25, %v445
  %v478 = vsub.f32 %v26, %v445
  %v479 = vsub.f32 %v27, %v445
  %v480 = vsub.f32 %v28, %v446
  %v481 = vsub.f32 %v29, %v446
  %v482 = vsub.f32 %v30, %v446
  %v483 = vsub.f32 %v31, %v446
  %v484 = vsub.f32 %v32, %v447
  %v485 = vsub.f32 %v33, %v447
  %v486 = vsub.f32 %v34, %v447
  %v487 = vsub.f32 %v35, %v447
  %v488 = vsub.f32 %v36, %v448
  %v489 = vsub.f32 %v37, %v448
  %v490 = vsub.f32 %v38, %v448
  %v491 = vsub.f32 %v39, %v448
  %v492 = vsub.f32 %v40, %v449
  %v493 = vsub.f32 %v41, %v449
  %v494 = vsub.f32 %v42, %v449
  %v495 = vsub.f32 %v43, %v449
  %v496 = vsub.f32 %v44, %v450
  %v497 = vsub.f32 %v45, %v450
  %v498 = vsub.f32 %v46, %v450
  %v499 = vsub.f32 %v47, %v450
  %v500 = vsub.f32 %v48, %v451
  %v501 = vsub.f32 %v49, %v451
  %v502 = vsub.f32 %v50, %v451
  %v503 = vsub.f32 %v51, %v451
  %v504 = vsub.f32 %v52, %v452
  %v505 = vsub.f32 %v53, %v452
  %v506 = vsub.f32 %v54, %v452
  %v507 = vsub.f32 %v55, %v452
  %v508 = vsub.f32 %v56, %v453
  %v509 = vsub.f32 %v57, %v453
  %v510 = vsub.f32 %v58, %v453
  %v511 = vsub.f32 %v59, %v453
  %v512 = vsub.f32 %v60, %v454
  %v513 = vsub.f32 %v61, %v454
  %v514 = vsub.f32 %v62, %v454
  %v515 = vsub.f32 %v63, %v454
  %v516 = vsub.f32 %v64, %v455
  %v517 = vsub.f32 %v65, %v455
  %v518 = vsub.f32 %v66, %v455
  %v519 = vsub.f32 %v67, %v455
  %v520 = vsub.f32 %v68, %v456
  %v521 = vsub.f32 %v69, %v456
  %v522 = vsub.f32 %v70, %v456
  %v523 = vsub.f32 %v71, %v456
  %v524 = vsub.f32 %v72, %v457
  %v525 = vsub.f32 %v73, %v457
  %v526 = vsub.f32 %v74, %v457
  %v527 = vsub.f32 %v75, %v457
  %v528 = vsub.f32 %v76, %v458
  %v529 = vsub.f32 %v77, %v458
  %v530 = vsub.f32 %v78, %v458
  %v531 = vsub.f32 %v79, %v458
  %v532 = vsub.f32 %v80, %v459
  %v533 = vsub.f32 %v81, %v459
  %v534 = vsub.f32 %v82, %v459
  %v535 = vsub.f32 %v83, %v459
  %v536 = vsub.f32 %v84, %v460
  %v537 = vsub.f32 %v85, %v460
  %v538 = vsub.f32 %v86, %v460
  %v539 = vsub.f32 %v87, %v460
  %v540 = vsub.f32 %v88, %v461
  %v541 = vsub.f32 %v89, %v461
  %v542 = vsub.f32 %v90, %v461
  %v543 = vsub.f32 %v91, %v461
  %v544 = vsub.f32 %v92, %v462
  %v545 = vsub.f32 %v93, %v462
  %v546 = vsub.f32 %v94, %v462
  %v547 = vsub.f32 %v95, %v462
  %v548 = vsub.f32 %v96, %v463
  %v549 = vsub.f32 %v97, %v463
  %v550 = vsub.f32 %v98, %v463
  %v551 = vsub.f32 %v99, %v463
  %v552 = vsub.f32 %v100, %v464
  %v553 = vsub.f32 %v101, %v464
  %v554 = vsub.f32 %v102, %v464
  %v555 = vsub.f32 %v103, %v464
  %v556 = vsub.f32 %v104, %v465
  %v557 = vsub.f32 %v105, %v465
  %v558 = vsub.f32 %v106, %v465
  %v559 = vsub.f32 %v107, %v465
  %v560 = vsub.f32 %v108, %v466
  %v561 = vsub.f32 %v109, %v466
  %v562 = vsub.f32 %v110, %v466
  %v563 = vsub.f32 %v111, %v466
  %v564 = vsub.f32 %v112, %v467
  %v565 = vsub.f32 %v113, %v467
  %v566 = vsub.f32 %v114, %v467
  %v567 = vsub.f32 %v115, %v467
  %v568 = vmul.f32 %v468, %v468
  %v569 = vmul.f32 %v469, %v469
  %v570 = vmul.f32 %v470, %v470
  %v571 = vmul.f32 %v471, %v471
  %v572 = vmul.f32 %v472, %v472
  %v573 = vmul.f32 %v473, %v473
  %v574 = vmul.f32 %v474, %v474
  %v575 = vmul.f32 %v475, %v475
  %v576 = vmul.f32 %v476, %v476
  %v577 = vmul.f32 %v477, %v477
  %v578 = vmul.f32 %v478, %v478
  %v579 = vmul.f32 %v479, %v479
  %v580 = vmul.f32 %v480, %v480
  %v581 = vmul.f32 %v481, %v481
  %v582 = vmul.f32 %v482, %v482
  %v583 = vmul.f32 %v483, %v483
  %v584 = vmul.f32 %v484, %v484
  %v585 = vmul.f32 %v485, %v485
  %v586 = vmul.f32 %v486, %v486
  %v587 = vmul.f32 %v487, %v487
  %v588 = vmul.f32 %v488, %v488
  %v589 = vmul.f32 %v489, %v489
  %v590 = vmul.f32 %v490, %v490
  %v591 = vmul.f32 %v491, %v491
  %v592 = vmul.f32 %v492, %v492
  %v593 = vmul.f32 %v493, %v493
  %v594 = vmul.f32 %v494, %v494
  %v595 = vmul.f32 %v495, %v495
  %v596 = vmul.f32 %v496, %v496
  %v597 = vmul.f32 %v497, %v497
  %v598 = vmul.f32 %v498, %v498
  %v599 = vmul.f32 %v499, %v499
  %v600 = vmul.f32 %v500, %v500
  %v601 = vmul.f32 %v501, %v501
  %v602 = vmul.f32 %v502, %v502
  %v603 = vmul.f32 %v503, %v503
  %v604 = vmul.f32 %v504, %v504
  %v605 = vmul.f32 %v505, %v505
  %v606 = vmul.f32 %v506, %v506
  %v607 = vmul.f32 %v507, %v507
  %v608 = vmul.f32 %v508, %v508
  %v609 = vmul.f32 %v509, %v509
  %v610 = vmul.f32 %v510, %v510
  %v611 = vmul.f32 %v511, %v511
  %v612 = vmul.f32 %v512, %v512
  %v613 = vmul.f32 %v513, %v513
  %v614 = vmul.f32 %v514, %v514
  %v615 = vmul.f32 %v515, %v515
  %v616 = vmul.f32 %v516, %v516
  %v617 = vmul.f32 %v517, %v517
  %v618 = vmul.f32 %v518, %v518
  %v619 = vmul.f32 %v519, %v519
  %v620 = vmul.f32 %v520, %v520
  %v621 = vmul.f32 %v521, %v521
  %v622 = vmul.f32 %v522, %v522
  %v623 = vmul.f32 %v523, %v523
  %v624 = vmul.f32 %v524, %v524
  %v625 = vmul.f32 %v525, %v525
  %v626 = vmul.f32 %v526, %v526
  %v627 = vmul.f32 %v527, %v527
  %v628 = vmul.f32 %v528, %v528
  %v629 = vmul.f32 %v529, %v529
  %v630 = vmul.f32 %v530, %v530
  %v631 = vmul.f32 %v531, %v531
  %v632 = vmul.f32 %v532, %v532
  %v633 = vmul.f32 %v533, %v533
  %v634 = vmul.f32 %v534, %v534
  %v635 = vmul.f32 %v535, %v535
  %v636 = vmul.f32 %v536, %v536
  %v637 = vmul.f32 %v537, %v537
  %v638 = vmul.f32 %v538, %v538
  %v639 = vmul.f32 %v539, %v539
  %v640 = vmul.f32 %v540, %v540
  %v641 = vmul.f32 %v541, %v541
  %v642 = vmul.f32 %v542, %v542
  %v643 = vmul.f32 %v543, %v543
  %v644 = vmul.f32 %v544, %v544
  %v645 = vmul.f32 %v545, %v545
  %v646 = vmul.f32 %v546, %v546
  %v647 = vmul.f32 %v547, %v547
  %v648 = vmul.f32 %v548, %v548
  %v649 = vmul.f32 %v549, %v549
  %v650 = vmul.f32 %v550, %v550
  %v651 = vmul.f32 %v551, %v551
  %v652 = vmul.f32 %v552, %v552
  %v653 = vmul.f32 %v553, %v553
  %v654 = vmul.f32 %v554, %v554
  %v655 = vmul.f32 %v555, %v555
  %v656 = vmul.f32 %v556, %v556
  %v657 = vmul.f32 %v557, %v557
  %v658 = vmul.f32 %v558, %v558
  %v659 = vmul.f32 %v559, %v559
  %v660 = vmul.f32 %v560, %v560
  %v661 = vmul.f32 %v561, %v561
  %v662 = vmul.f32 %v562, %v562
  %v663 = vmul.f32 %v563, %v563
  %v664 = vmul.f32 %v564, %v564
  %v665 = vmul.f32 %v565, %v565
  %v666 = vmul.f32 %v566, %v566
  %v667 = vmul.f32 %v567, %v567
  %v668 = vsel %vm116, %v568, 0.0
  %v669 = vsel %vm116, %v569, 0.0
  %v670 = vadd.f32 %v668, %v669
  %v671 = vsel %vm116, %v570, 0.0
  %v672 = vadd.f32 %v670, %v671
  %v673 = vsel %vm116, %v571, 0.0
  %v674 = vadd.f32 %v672, %v673
  %v675 = vrot.slane %v674, 4
  %v676 = vadd.f32 %v674, %v675
  %v677 = vrot.slane %v676, 2
  %v678 = vadd.f32 %v676, %v677
  %v679 = vrot.slane %v678, 1
  %v680 = vadd.f32 %v678, %v679
  %v681 = vsel %vm116, %v572, 0.0
  %v682 = vsel %vm116, %v573, 0.0
  %v683 = vadd.f32 %v681, %v682
  %v684 = vsel %vm116, %v574, 0.0
  %v685 = vadd.f32 %v683, %v684
  %v686 = vsel %vm116, %v575, 0.0
  %v687 = vadd.f32 %v685, %v686
  %v688 = vrot.slane %v687, 4
  %v689 = vadd.f32 %v687, %v688
  %v690 = vrot.slane %v689, 2
  %v691 = vadd.f32 %v689, %v690
  %v692 = vrot.slane %v691, 1
  %v693 = vadd.f32 %v691, %v692
  %v694 = vsel %vm116, %v576, 0.0
  %v695 = vsel %vm116, %v577, 0.0
  %v696 = vadd.f32 %v694, %v695
  %v697 = vsel %vm116, %v578, 0.0
  %v698 = vadd.f32 %v696, %v697
  %v699 = vsel %vm116, %v579, 0.0
  %v700 = vadd.f32 %v698, %v699
  %v701 = vrot.slane %v700, 4
  %v702 = vadd.f32 %v700, %v701
  %v703 = vrot.slane %v702, 2
  %v704 = vadd.f32 %v702, %v703
  %v705 = vrot.slane %v704, 1
  %v706 = vadd.f32 %v704, %v705
  %v707 = vsel %vm116, %v580, 0.0
  %v708 = vsel %vm116, %v581, 0.0
  %v709 = vadd.f32 %v707, %v708
  %v710 = vsel %vm116, %v582, 0.0
  %v711 = vadd.f32 %v709, %v710
  %v712 = vsel %vm116, %v583, 0.0
  %v713 = vadd.f32 %v711, %v712
  %v714 = vrot.slane %v713, 4
  %v715 = vadd.f32 %v713, %v714
  %v716 = vrot.slane %v715, 2
  %v717 = vadd.f32 %v715, %v716
  %v718 = vrot.slane %v717, 1
  %v719 = vadd.f32 %v717, %v718
  %v720 = vsel %vm116, %v584, 0.0
  %v721 = vsel %vm116, %v585, 0.0
  %v722 = vadd.f32 %v720, %v721
  %v723 = vsel %vm116, %v586, 0.0
  %v724 = vadd.f32 %v722, %v723
  %v725 = vsel %vm116, %v587, 0.0
  %v726 = vadd.f32 %v724, %v725
  %v727 = vrot.slane %v726, 4
  %v728 = vadd.f32 %v726, %v727
  %v729 = vrot.slane %v728, 2
  %v730 = vadd.f32 %v728, %v729
  %v731 = vrot.slane %v730, 1
  %v732 = vadd.f32 %v730, %v731
  %v733 = vsel %vm116, %v588, 0.0
  %v734 = vsel %vm116, %v589, 0.0
  %v735 = vadd.f32 %v733, %v734
  %v736 = vsel %vm116, %v590, 0.0
  %v737 = vadd.f32 %v735, %v736
  %v738 = vsel %vm116, %v591, 0.0
  %v739 = vadd.f32 %v737, %v738
  %v740 = vrot.slane %v739, 4
  %v741 = vadd.f32 %v739, %v740
  %v742 = vrot.slane %v741, 2
  %v743 = vadd.f32 %v741, %v742
  %v744 = vrot.slane %v743, 1
  %v745 = vadd.f32 %v743, %v744
  %v746 = vsel %vm116, %v592, 0.0
  %v747 = vsel %vm116, %v593, 0.0
  %v748 = vadd.f32 %v746, %v747
  %v749 = vsel %vm116, %v594, 0.0
  %v750 = vadd.f32 %v748, %v749
  %v751 = vsel %vm116, %v595, 0.0
  %v752 = vadd.f32 %v750, %v751
  %v753 = vrot.slane %v752, 4
  %v754 = vadd.f32 %v752, %v753
  %v755 = vrot.slane %v754, 2
  %v756 = vadd.f32 %v754, %v755
  %v757 = vrot.slane %v756, 1
  %v758 = vadd.f32 %v756, %v757
  %v759 = vsel %vm116, %v596, 0.0
  %v760 = vsel %vm116, %v597, 0.0
  %v761 = vadd.f32 %v759, %v760
  %v762 = vsel %vm116, %v598, 0.0
  %v763 = vadd.f32 %v761, %v762
  %v764 = vsel %vm116, %v599, 0.0
  %v765 = vadd.f32 %v763, %v764
  %v766 = vrot.slane %v765, 4
  %v767 = vadd.f32 %v765, %v766
  %v768 = vrot.slane %v767, 2
  %v769 = vadd.f32 %v767, %v768
  %v770 = vrot.slane %v769, 1
  %v771 = vadd.f32 %v769, %v770
  %v772 = vsel %vm116, %v600, 0.0
  %v773 = vsel %vm116, %v601, 0.0
  %v774 = vadd.f32 %v772, %v773
  %v775 = vsel %vm116, %v602, 0.0
  %v776 = vadd.f32 %v774, %v775
  %v777 = vsel %vm116, %v603, 0.0
  %v778 = vadd.f32 %v776, %v777
  %v779 = vrot.slane %v778, 4
  %v780 = vadd.f32 %v778, %v779
  %v781 = vrot.slane %v780, 2
  %v782 = vadd.f32 %v780, %v781
  %v783 = vrot.slane %v782, 1
  %v784 = vadd.f32 %v782, %v783
  %v785 = vsel %vm116, %v604, 0.0
  %v786 = vsel %vm116, %v605, 0.0
  %v787 = vadd.f32 %v785, %v786
  %v788 = vsel %vm116, %v606, 0.0
  %v789 = vadd.f32 %v787, %v788
  %v790 = vsel %vm116, %v607, 0.0
  %v791 = vadd.f32 %v789, %v790
  %v792 = vrot.slane %v791, 4
  %v793 = vadd.f32 %v791, %v792
  %v794 = vrot.slane %v793, 2
  %v795 = vadd.f32 %v793, %v794
  %v796 = vrot.slane %v795, 1
  %v797 = vadd.f32 %v795, %v796
  %v798 = vsel %vm116, %v608, 0.0
  %v799 = vsel %vm116, %v609, 0.0
  %v800 = vadd.f32 %v798, %v799
  %v801 = vsel %vm116, %v610, 0.0
  %v802 = vadd.f32 %v800, %v801
  %v803 = vsel %vm116, %v611, 0.0
  %v804 = vadd.f32 %v802, %v803
  %v805 = vrot.slane %v804, 4
  %v806 = vadd.f32 %v804, %v805
  %v807 = vrot.slane %v806, 2
  %v808 = vadd.f32 %v806, %v807
  %v809 = vrot.slane %v808, 1
  %v810 = vadd.f32 %v808, %v809
  %v811 = vsel %vm116, %v612, 0.0
  %v812 = vsel %vm116, %v613, 0.0
  %v813 = vadd.f32 %v811, %v812
  %v814 = vsel %vm116, %v614, 0.0
  %v815 = vadd.f32 %v813, %v814
  %v816 = vsel %vm116, %v615, 0.0
  %v817 = vadd.f32 %v815, %v816
  %v818 = vrot.slane %v817, 4
  %v819 = vadd.f32 %v817, %v818
  %v820 = vrot.slane %v819, 2
  %v821 = vadd.f32 %v819, %v820
  %v822 = vrot.slane %v821, 1
  %v823 = vadd.f32 %v821, %v822
  %v824 = vsel %vm116, %v616, 0.0
  %v825 = vsel %vm116, %v617, 0.0
  %v826 = vadd.f32 %v824, %v825
  %v827 = vsel %vm116, %v618, 0.0
  %v828 = vadd.f32 %v826, %v827
  %v829 = vsel %vm116, %v619, 0.0
  %v830 = vadd.f32 %v828, %v829
  %v831 = vrot.slane %v830, 4
  %v832 = vadd.f32 %v830, %v831
  %v833 = vrot.slane %v832, 2
  %v834 = vadd.f32 %v832, %v833
  %v835 = vrot.slane %v834, 1
  %v836 = vadd.f32 %v834, %v835
  %v837 = vsel %vm116, %v620, 0.0
  %v838 = vsel %vm116, %v621, 0.0
  %v839 = vadd.f32 %v837, %v838
  %v840 = vsel %vm116, %v622, 0.0
  %v841 = vadd.f32 %v839, %v840
  %v842 = vsel %vm116, %v623, 0.0
  %v843 = vadd.f32 %v841, %v842
  %v844 = vrot.slane %v843, 4
  %v845 = vadd.f32 %v843, %v844
  %v846 = vrot.slane %v845, 2
  %v847 = vadd.f32 %v845, %v846
  %v848 = vrot.slane %v847, 1
  %v849 = vadd.f32 %v847, %v848
  %v850 = vsel %vm116, %v624, 0.0
  %v851 = vsel %vm116, %v625, 0.0
  %v852 = vadd.f32 %v850, %v851
  %v853 = vsel %vm116, %v626, 0.0
  %v854 = vadd.f32 %v852, %v853
  %v855 = vsel %vm116, %v627, 0.0
  %v856 = vadd.f32 %v854, %v855
  %v857 = vrot.slane %v856, 4
  %v858 = vadd.f32 %v856, %v857
  %v859 = vrot.slane %v858, 2
  %v860 = vadd.f32 %v858, %v859
  %v861 = vrot.slane %v860, 1
  %v862 = vadd.f32 %v860, %v861
  %v863 = vsel %vm116, %v628, 0.0
  %v864 = vsel %vm116, %v629, 0.0
  %v865 = vadd.f32 %v863, %v864
  %v866 = vsel %vm116, %v630, 0.0
  %v867 = vadd.f32 %v865, %v866
  %v868 = vsel %vm116, %v631, 0.0
  %v869 = vadd.f32 %v867, %v868
  %v870 = vrot.slane %v869, 4
  %v871 = vadd.f32 %v869, %v870
  %v872 = vrot.slane %v871, 2
  %v873 = vadd.f32 %v871, %v872
  %v874 = vrot.slane %v873, 1
  %v875 = vadd.f32 %v873, %v874
  %v876 = vsel %vm116, %v632, 0.0
  %v877 = vsel %vm116, %v633, 0.0
  %v878 = vadd.f32 %v876, %v877
  %v879 = vsel %vm116, %v634, 0.0
  %v880 = vadd.f32 %v878, %v879
  %v881 = vsel %vm116, %v635, 0.0
  %v882 = vadd.f32 %v880, %v881
  %v883 = vrot.slane %v882, 4
  %v884 = vadd.f32 %v882, %v883
  %v885 = vrot.slane %v884, 2
  %v886 = vadd.f32 %v884, %v885
  %v887 = vrot.slane %v886, 1
  %v888 = vadd.f32 %v886, %v887
  %v889 = vsel %vm116, %v636, 0.0
  %v890 = vsel %vm116, %v637, 0.0
  %v891 = vadd.f32 %v889, %v890
  %v892 = vsel %vm116, %v638, 0.0
  %v893 = vadd.f32 %v891, %v892
  %v894 = vsel %vm116, %v639, 0.0
  %v895 = vadd.f32 %v893, %v894
  %v896 = vrot.slane %v895, 4
  %v897 = vadd.f32 %v895, %v896
  %v898 = vrot.slane %v897, 2
  %v899 = vadd.f32 %v897, %v898
  %v900 = vrot.slane %v899, 1
  %v901 = vadd.f32 %v899, %v900
  %v902 = vsel %vm116, %v640, 0.0
  %v903 = vsel %vm116, %v641, 0.0
  %v904 = vadd.f32 %v902, %v903
  %v905 = vsel %vm116, %v642, 0.0
  %v906 = vadd.f32 %v904, %v905
  %v907 = vsel %vm116, %v643, 0.0
  %v908 = vadd.f32 %v906, %v907
  %v909 = vrot.slane %v908, 4
  %v910 = vadd.f32 %v908, %v909
  %v911 = vrot.slane %v910, 2
  %v912 = vadd.f32 %v910, %v911
  %v913 = vrot.slane %v912, 1
  %v914 = vadd.f32 %v912, %v913
  %v915 = vsel %vm116, %v644, 0.0
  %v916 = vsel %vm116, %v645, 0.0
  %v917 = vadd.f32 %v915, %v916
  %v918 = vsel %vm116, %v646, 0.0
  %v919 = vadd.f32 %v917, %v918
  %v920 = vsel %vm116, %v647, 0.0
  %v921 = vadd.f32 %v919, %v920
  %v922 = vrot.slane %v921, 4
  %v923 = vadd.f32 %v921, %v922
  %v924 = vrot.slane %v923, 2
  %v925 = vadd.f32 %v923, %v924
  %v926 = vrot.slane %v925, 1
  %v927 = vadd.f32 %v925, %v926
  %v928 = vsel %vm116, %v648, 0.0
  %v929 = vsel %vm116, %v649, 0.0
  %v930 = vadd.f32 %v928, %v929
  %v931 = vsel %vm116, %v650, 0.0
  %v932 = vadd.f32 %v930, %v931
  %v933 = vsel %vm116, %v651, 0.0
  %v934 = vadd.f32 %v932, %v933
  %v935 = vrot.slane %v934, 4
  %v936 = vadd.f32 %v934, %v935
  %v937 = vrot.slane %v936, 2
  %v938 = vadd.f32 %v936, %v937
  %v939 = vrot.slane %v938, 1
  %v940 = vadd.f32 %v938, %v939
  %v941 = vsel %vm116, %v652, 0.0
  %v942 = vsel %vm116, %v653, 0.0
  %v943 = vadd.f32 %v941, %v942
  %v944 = vsel %vm116, %v654, 0.0
  %v945 = vadd.f32 %v943, %v944
  %v946 = vsel %vm116, %v655, 0.0
  %v947 = vadd.f32 %v945, %v946
  %v948 = vrot.slane %v947, 4
  %v949 = vadd.f32 %v947, %v948
  %v950 = vrot.slane %v949, 2
  %v951 = vadd.f32 %v949, %v950
  %v952 = vrot.slane %v951, 1
  %v953 = vadd.f32 %v951, %v952
  %v954 = vsel %vm116, %v656, 0.0
  %v955 = vsel %vm116, %v657, 0.0
  %v956 = vadd.f32 %v954, %v955
  %v957 = vsel %vm116, %v658, 0.0
  %v958 = vadd.f32 %v956, %v957
  %v959 = vsel %vm116, %v659, 0.0
  %v960 = vadd.f32 %v958, %v959
  %v961 = vrot.slane %v960, 4
  %v962 = vadd.f32 %v960, %v961
  %v963 = vrot.slane %v962, 2
  %v964 = vadd.f32 %v962, %v963
  %v965 = vrot.slane %v964, 1
  %v966 = vadd.f32 %v964, %v965
  %v967 = vsel %vm116, %v660, 0.0
  %v968 = vsel %vm116, %v661, 0.0
  %v969 = vadd.f32 %v967, %v968
  %v970 = vsel %vm116, %v662, 0.0
  %v971 = vadd.f32 %v969, %v970
  %v972 = vsel %vm116, %v663, 0.0
  %v973 = vadd.f32 %v971, %v972
  %v974 = vrot.slane %v973, 4
  %v975 = vadd.f32 %v973, %v974
  %v976 = vrot.slane %v975, 2
  %v977 = vadd.f32 %v975, %v976
  %v978 = vrot.slane %v977, 1
  %v979 = vadd.f32 %v977, %v978
  %v980 = vsel %vm116, %v664, 0.0
  %v981 = vsel %vm116, %v665, 0.0
  %v982 = vadd.f32 %v980, %v981
  %v983 = vsel %vm116, %v666, 0.0
  %v984 = vadd.f32 %v982, %v983
  %v985 = vsel %vm116, %v667, 0.0
  %v986 = vadd.f32 %v984, %v985
  %v987 = vrot.slane %v986, 4
  %v988 = vadd.f32 %v986, %v987
  %v989 = vrot.slane %v988, 2
  %v990 = vadd.f32 %v988, %v989
  %v991 = vrot.slane %v990, 1
  %v992 = vadd.f32 %v990, %v991
  %v993 = vmul.f32 %v680, %v442
  %v994 = vmul.f32 %v693, %v442
  %v995 = vmul.f32 %v706, %v442
  %v996 = vmul.f32 %v719, %v442
  %v997 = vmul.f32 %v732, %v442
  %v998 = vmul.f32 %v745, %v442
  %v999 = vmul.f32 %v758, %v442
  %v1000 = vmul.f32 %v771, %v442
  %v1001 = vmul.f32 %v784, %v442
  %v1002 = vmul.f32 %v797, %v442
  %v1003 = vmul.f32 %v810, %v442
  %v1004 = vmul.f32 %v823, %v442
  %v1005 = vmul.f32 %v836, %v442
  %v1006 = vmul.f32 %v849, %v442
  %v1007 = vmul.f32 %v862, %v442
  %v1008 = vmul.f32 %v875, %v442
  %v1009 = vmul.f32 %v888, %v442
  %v1010 = vmul.f32 %v901, %v442
  %v1011 = vmul.f32 %v914, %v442
  %v1012 = vmul.f32 %v927, %v442
  %v1013 = vmul.f32 %v940, %v442
  %v1014 = vmul.f32 %v953, %v442
  %v1015 = vmul.f32 %v966, %v442
  %v1016 = vmul.f32 %v979, %v442
  %v1017 = vmul.f32 %v992, %v442
  %v1018 = vadd.f32 %v993, 1e-05
  %v1019 = vadd.f32 %v994, 1e-05
  %v1020 = vadd.f32 %v995, 1e-05
  %v1021 = vadd.f32 %v996, 1e-05
  %v1022 = vadd.f32 %v997, 1e-05
  %v1023 = vadd.f32 %v998, 1e-05
  %v1024 = vadd.f32 %v999, 1e-05
  %v1025 = vadd.f32 %v1000, 1e-05
  %v1026 = vadd.f32 %v1001, 1e-05
  %v1027 = vadd.f32 %v1002, 1e-05
  %v1028 = vadd.f32 %v1003, 1e-05
  %v1029 = vadd.f32 %v1004, 1e-05
  %v1030 = vadd.f32 %v1005, 1e-05
  %v1031 = vadd.f32 %v1006, 1e-05
  %v1032 = vadd.f32 %v1007, 1e-05
  %v1033 = vadd.f32 %v1008, 1e-05
  %v1034 = vadd.f32 %v1009, 1e-05
  %v1035 = vadd.f32 %v1010, 1e-05
  %v1036 = vadd.f32 %v1011, 1e-05
  %v1037 = vadd.f32 %v1012, 1e-05
  %v1038 = vadd.f32 %v1013, 1e-05
  %v1039 = vadd.f32 %v1014, 1e-05
  %v1040 = vadd.f32 %v1015, 1e-05
  %v1041 = vadd.f32 %v1016, 1e-05
  %v1042 = vadd.f32 %v1017, 1e-05
  %v1043 = vrsqrt.pop %v1018
  %v1044 = vrsqrt.pop %v1019
  %v1045 = vrsqrt.pop %v1020
  %v1046 = vrsqrt.pop %v1021
  %v1047 = vrsqrt.pop %v1022
  %v1048 = vrsqrt.pop %v1023
  %v1049 = vrsqrt.pop %v1024
  %v1050 = vrsqrt.pop %v1025
  %v1051 = vrsqrt.pop %v1026
  %v1052 = vrsqrt.pop %v1027
  %v1053 = vrsqrt.pop %v1028
  %v1054 = vrsqrt.pop %v1029
  %v1055 = vrsqrt.pop %v1030
  %v1056 = vrsqrt.pop %v1031
  %v1057 = vrsqrt.pop %v1032
  %v1058 = vrsqrt.pop %v1033
  %v1059 = vrsqrt.pop %v1034
  %v1060 = vrsqrt.pop %v1035
  %v1061 = vrsqrt.pop %v1036
  %v1062 = vrsqrt.pop %v1037
  %v1063 = vrsqrt.pop %v1038
  %v1064 = vrsqrt.pop %v1039
  %v1065 = vrsqrt.pop %v1040
  %v1066 = vrsqrt.pop %v1041
  %v1067 = vrsqrt.pop %v1042
  %v1068 = vld [vmem:[%s1] sm:$0xff]
  %v1069 = vld [vmem:[%s1 + $0x8] sm:$0xff]
  %v1070 = vld [vmem:[%s1 + $0x10] sm:$0xff]
  %v1071 = vld [vmem:[%s1 + $0x18] sm:$0x1]
  %vm1097 = vcmask 1041409
  %v1098 = vsel %vm1097, %v1044, %v1043
  %vm1099 = vcmask 1042434
  %v1100 = vsel %vm1099, %v1045, %v1098
  %vm1101 = vcmask 1043459
  %v1102 = vsel %vm1101, %v1046, %v1100
  %vm1103 = vcmask 1044484
  %v1104 = vsel %vm1103, %v1047, %v1102
  %vm1105 = vcmask 1045509
  %v1106 = vsel %vm1105, %v1048, %v1104
  %vm1107 = vcmask 1046534
  %v1108 = vsel %vm1107, %v1049, %v1106
  %vm1109 = vcmask 1047559
  %v1110 = vsel %vm1109, %v1050, %v1108
  %v1111 = vsel %vm1097, %v1052, %v1051
  %v1112 = vsel %vm1099, %v1053, %v1111
  %v1113 = vsel %vm1101, %v1054, %v1112
  %v1114 = vsel %vm1103, %v1055, %v1113
  %v1115 = vsel %vm1105, %v1056, %v1114
  %v1116 = vsel %vm1107, %v1057, %v1115
  %v1117 = vsel %vm1109, %v1058, %v1116
  %v1118 = vsel %vm1097, %v1060, %v1059
  %v1119 = vsel %vm1099, %v1061, %v1118
  %v1120 = vsel %vm1101, %v1062, %v1119
  %v1121 = vsel %vm1103, %v1063, %v1120
  %v1122 = vsel %vm1105, %v1064, %v1121
  %v1123 = vsel %vm1107, %v1065, %v1122
  %v1124 = vsel %vm1109, %v1066, %v1123
  %v1129 = vmul.f32 %v1068, %v1110
  %v1130 = vmul.f32 %v1069, %v1117
  %v1131 = vmul.f32 %v1070, %v1124
  %v1132 = vmul.f32 %v1071, %v1067
  %1133 = vst.msk [vmem:[%s3] sm:$0xff] %vm116, %v1129
  %1134 = vst.msk [vmem:[%s3 + $0x8] sm:$0xff] %vm116, %v1130
  %1135 = vst.msk [vmem:[%s3 + $0x10] sm:$0xff] %vm116, %v1131
  %vm1136 = vcmask 16384
  %1137 = vst.msk [vmem:[%s3 + $0x18] sm:$0x1] %vm1136, %v1132
  %v1138 = vld [vmem:[%s2] sm:$0xff]
  %v1139 = vld [vmem:[%s2 + $0x8] sm:$0xff]
  %v1140 = vld [vmem:[%s2 + $0x10] sm:$0xff]
  %v1141 = vld [vmem:[%s2 + $0x18] sm:$0x1]
  %v1146 = vrot.slane %v1129, 1
  %v1147 = vrot.slane %v1129, 2
  %v1148 = vrot.slane %v1129, 3
  %v1149 = vrot.slane %v1129, 4
  %v1150 = vrot.slane %v1129, 5
  %v1151 = vrot.slane %v1129, 6
  %v1152 = vrot.slane %v1129, 7
  %v1153 = vrot.slane %v1130, 1
  %v1154 = vrot.slane %v1130, 2
  %v1155 = vrot.slane %v1130, 3
  %v1156 = vrot.slane %v1130, 4
  %v1157 = vrot.slane %v1130, 5
  %v1158 = vrot.slane %v1130, 6
  %v1159 = vrot.slane %v1130, 7
  %v1160 = vrot.slane %v1131, 1
  %v1161 = vrot.slane %v1131, 2
  %v1162 = vrot.slane %v1131, 3
  %v1163 = vrot.slane %v1131, 4
  %v1164 = vrot.slane %v1131, 5
  %v1165 = vrot.slane %v1131, 6
  %v1166 = vrot.slane %v1131, 7
  %v1192 = vmul.f32 %v443, %v1129
  %v1193 = vmul.f32 %v444, %v1146
  %v1194 = vmul.f32 %v445, %v1147
  %v1195 = vmul.f32 %v446, %v1148
  %v1196 = vmul.f32 %v447, %v1149
  %v1197 = vmul.f32 %v448, %v1150
  %v1198 = vmul.f32 %v449, %v1151
  %v1199 = vmul.f32 %v450, %v1152
  %v1200 = vmul.f32 %v451, %v1130
  %v1201 = vmul.f32 %v452, %v1153
  %v1202 = vmul.f32 %v453, %v1154
  %v1203 = vmul.f32 %v454, %v1155
  %v1204 = vmul.f32 %v455, %v1156
  %v1205 = vmul.f32 %v456, %v1157
  %v1206 = vmul.f32 %v457, %v1158
  %v1207 = vmul.f32 %v458, %v1159
  %v1208 = vmul.f32 %v459, %v1131
  %v1209 = vmul.f32 %v460, %v1160
  %v1210 = vmul.f32 %v461, %v1161
  %v1211 = vmul.f32 %v462, %v1162
  %v1212 = vmul.f32 %v463, %v1163
  %v1213 = vmul.f32 %v464, %v1164
  %v1214 = vmul.f32 %v465, %v1165
  %v1215 = vmul.f32 %v466, %v1166
  %v1216 = vmul.f32 %v467, %v1132
  %v1242 = vrot.slane %v1193, 7
  %v1243 = vsel %vm1097, %v1242, %v1192
  %v1244 = vrot.slane %v1194, 6
  %v1245 = vsel %vm1099, %v1244, %v1243
  %v1246 = vrot.slane %v1195, 5
  %v1247 = vsel %vm1101, %v1246, %v1245
  %v1248 = vrot.slane %v1196, 4
  %v1249 = vsel %vm1103, %v1248, %v1247
  %v1250 = vrot.slane %v1197, 3
  %v1251 = vsel %vm1105, %v1250, %v1249
  %v1252 = vrot.slane %v1198, 2
  %v1253 = vsel %vm1107, %v1252, %v1251
  %v1254 = vrot.slane %v1199, 1
  %v1255 = vsel %vm1109, %v1254, %v1253
  %v1256 = vrot.slane %v1201, 7
  %v1257 = vsel %vm1097, %v1256, %v1200
  %v1258 = vrot.slane %v1202, 6
  %v1259 = vsel %vm1099, %v1258, %v1257
  %v1260 = vrot.slane %v1203, 5
  %v1261 = vsel %vm1101, %v1260, %v1259
  %v1262 = vrot.slane %v1204, 4
  %v1263 = vsel %vm1103, %v1262, %v1261
  %v1264 = vrot.slane %v1205, 3
  %v1265 = vsel %vm1105, %v1264, %v1263
  %v1266 = vrot.slane %v1206, 2
  %v1267 = vsel %vm1107, %v1266, %v1265
  %v1268 = vrot.slane %v1207, 1
  %v1269 = vsel %vm1109, %v1268, %v1267
  %v1270 = vrot.slane %v1209, 7
  %v1271 = vsel %vm1097, %v1270, %v1208
  %v1272 = vrot.slane %v1210, 6
  %v1273 = vsel %vm1099, %v1272, %v1271
  %v1274 = vrot.slane %v1211, 5
  %v1275 = vsel %vm1101, %v1274, %v1273
  %v1276 = vrot.slane %v1212, 4
  %v1277 = vsel %vm1103, %v1276, %v1275
  %v1278 = vrot.slane %v1213, 3
  %v1279 = vsel %vm1105, %v1278, %v1277
  %v1280 = vrot.slane %v1214, 2
  %v1281 = vsel %vm1107, %v1280, %v1279
  %v1282 = vrot.slane %v1215, 1
  %v1283 = vsel %vm1109, %v1282, %v1281
  %v1288 = vsub.f32 %v1138, %v1255
  %v1289 = vsub.f32 %v1139, %v1269
  %v1290 = vsub.f32 %v1140, %v1283
  %v1291 = vsub.f32 %v1141, %v1216
  %1292 = vst.msk [vmem:[%s4] sm:$0xff] %vm116, %v1288
  %1293 = vst.msk [vmem:[%s4 + $0x8] sm:$0xff] %vm116, %v1289
  %1294 = vst.msk [vmem:[%s4 + $0x10] sm:$0xff] %vm116, %v1290
  %1295 = vst.msk [vmem:[%s4 + $0x18] sm:$0x1] %vm1136, %v1291
  // Predicated region
  $region14: #{tpu_custom_call.1} parent=0 // pred_check
    _
  $region15: #{tpu_custom_call.1} parent=0 // pred_check_branch
    %1297 = sbr.rel (0) target = $region17
  $region16: #{tpu_custom_call.1} parent=0 // pred_region
    _
  $region17: #{tpu_custom_call.1} parent=0 // pred_fallthru
    _
  // Predicated region
  $region18: #{tpu_custom_call.1} parent=0 // pred_check
    _
  $region19: #{tpu_custom_call.1} parent=0 // pred_check_branch
    %1299 = sbr.rel (0) target = $region21
  $region20: #{tpu_custom_call.1} parent=0 // pred_region
    _
  $region21: #{tpu_custom_call.1} parent=0 // pred_fallthru
    _
  // Predicated region
  $region22: #{tpu_custom_call.1} parent=0 // pred_check
    _
  $region23: #{tpu_custom_call.1} parent=0 // pred_check_branch
    %1301 = sbr.rel (0) target = $region25
  $region24: #{tpu_custom_call.1} parent=0 // pred_region
    _
  $region25: #{tpu_custom_call.1} parent=0 // pred_fallthru
    _
  // Predicated region
  $region26: #{tpu_custom_call.1} parent=0 // pred_check
    _
  $region27: #{tpu_custom_call.1} parent=0 // pred_check_branch
    %1303 = sbr.rel (0) target = $region29
  $region28: #{tpu_custom_call.1} parent=0 // pred_region
    _
  $region29: #{tpu_custom_call.1} parent=0 // pred_fallthru
    _

</llo_original>
